<compile_context>
chip_gen: v7x
topology: tpu7x:2x2x1
jax: 0.10.0
libtpu: 0.0.40
codegen_flags: <defaults>
</compile_context>

<pallas_src>
import math

import jax
import jax.numpy as jnp
import numpy as np
from jax.experimental import pallas as pl
from jax.experimental.pallas import tpu as pltpu

C_PAD = 128  # lane-padded number of classes (real classes in first num_labels cols)


def _round_up(x: int, m: int) -> int:
    return (x + m - 1) // m * m


# ----------------------------------------------------------------------------
# Pallas kernel: GELU + dropout + classifier matmul + masked cross-entropy
# ----------------------------------------------------------------------------
def _make_head_kernel(num_labels: int, dropout_p: float, train: bool):
    keep_prob = 1.0 - float(dropout_p)
    inv_keep = 1.0 / keep_prob if keep_prob > 0.0 else 0.0
    # keep iff (hash & 0x7FFFFFFF) < keep_prob * 2^31
    keep_threshold = min(int(keep_prob * 2147483648.0), 2147483647)
    c_gelu = math.sqrt(2.0 / math.pi)
    MIX1 = 0x7FEB352D
    MIX2 = 0x846CA68B - (1 << 32)       # as signed int32
    GOLD = 0x9E3779B1 - (1 << 32)       # golden-ratio constant, signed int32

    def kernel(seed_ref,                      # scalar prefetch (SMEM)
               x_ref, w_ref, b_ref, lm_ref,   # inputs (VMEM)
               logits_ref, part_ref):         # outputs (VMEM)
        i = pl.program_id(0)

        x = x_ref[...].astype(jnp.float32)                    # (TM, H)

        # GELU activation.
        # TODO(synk): torch.nn.GELU() default is the erf-exact form; the tanh
        # approximation is used here (|err| ~ 1e-3) since lax.erf lowering on
        # Mosaic is not guaranteed.
        h = 0.5 * x * (1.0 + jnp.tanh(c_gelu * (x + 0.044715 * x * x * x)))

        # Dropout (train mode only; specialized at trace time).  Uses a pure
        # int32 hash so it lowers on both Mosaic TPU and the CPU interpreter.
        if train and dropout_p > 0.0:
            tm_, hd = h.shape
            gr = jax.lax.broadcasted_iota(jnp.int32, h.shape, 0) + i * tm_
            gc = jax.lax.broadcasted_iota(jnp.int32, h.shape, 1)
            z = gr * jnp.int32(hd) + gc + seed_ref[0] * jnp.int32(GOLD)
            # lowbias32-style mixer; (>>k)&mask == logical right shift on int32.
            z = z ^ ((z >> 16) & jnp.int32(0x0000FFFF))
            z = z * jnp.int32(MIX1)
            z = z ^ ((z >> 15) & jnp.int32(0x0001FFFF))
            z = z * jnp.int32(MIX2)
            z = z ^ ((z >> 16) & jnp.int32(0x0000FFFF))
            bits = z & jnp.int32(0x7FFFFFFF)
            keep = bits < jnp.int32(keep_threshold)
            h = jnp.where(keep, h * jnp.float32(inv_keep), 0.0)

        # Classifier: logits = h @ W + b  (MXU matmul, f32 accumulate).
        logits = jnp.dot(h, w_ref[...], preferred_element_type=jnp.float32)
        logits = logits + b_ref[...]
        logits_ref[...] = logits.astype(logits_ref.dtype)

        # Decode packed (label | mask<<16) side stream.
        packed = lm_ref[...]                                   # (TM, 1) int32
        labels = packed & jnp.int32(0xFFFF)                    # (TM, 1)
        amask = ((packed >> 16) & jnp.int32(1)).astype(jnp.float32)  # (TM, 1)

        # Masked cross-entropy over the first `num_labels` columns.
        col = jax.lax.broadcasted_iota(jnp.int32, logits.shape, 1)   # (TM, C_PAD)
        valid = col < num_labels
        ml = jnp.where(valid, logits, jnp.float32(-1e30))
        m = jnp.max(ml, axis=-1, keepdims=True)                      # (TM, 1)
        lse = m + jnp.log(
            jnp.sum(jnp.where(valid, jnp.exp(ml - m), 0.0),
                    axis=-1, keepdims=True))                         # (TM, 1)
        picked = jnp.sum(jnp.where(col == labels, logits, 0.0),
                         axis=-1, keepdims=True)                     # (TM, 1)
        ce = (lse - picked) * amask                                  # (TM, 1)

        # Per-tile partial sums -> lane-padded (8,128) slab: [0,0]=sum, [0,1]=cnt.
        tile_sum = jnp.sum(ce, keepdims=True)                        # (1, 1)
        tile_cnt = jnp.sum(amask, keepdims=True)                     # (1, 1)
        r8 = jax.lax.broadcasted_iota(jnp.int32, (8, 128), 0)
        c8 = jax.lax.broadcasted_iota(jnp.int32, (8, 128), 1)
        slab = jnp.where((r8 == 0) & (c8 == 0), tile_sum,
                         jnp.where((r8 == 0) & (c8 == 1), tile_cnt, 0.0))
        part_ref[...] = slab

    return kernel


def ner_head(seq_out, w, b, labels, attention_mask, *,
             num_labels, dropout_p=0.1, train=False, seed=0, tm=512):
    """Fused GELU + dropout + classifier + masked-mean cross-entropy."""
    B, S, H = seq_out.shape
    N = B * S

    # Tile the token axis: big tiles for real workloads, shrink for tiny demos.
    # NOTE: lane efficiency wants H % 128 == 0 (true for real BERT, H=768);
    # smaller H is functionally fine because the block spans the full H dim.
    tm_eff = min(tm, _round_up(N, 8))
    n_pad = _round_up(N, tm_eff)
    num_tiles = n_pad // tm_eff

    # Dominant HBM stream in bf16 (halves DMA bytes); widened in-kernel.
    x = seq_out.reshape(N, H).astype(jnp.bfloat16)
    if n_pad != N:
        x = jnp.pad(x, ((0, n_pad - N), (0, 0)))

    w_pad = jnp.zeros((H, C_PAD), jnp.float32).at[:, :num_labels].set(
        w.astype(jnp.float32))
    b_pad = jnp.zeros((1, C_PAD), jnp.float32).at[0, :num_labels].set(
        b.astype(jnp.float32))

    # Pack labels and attention mask into one int32 side stream.
    lab = jnp.maximum(labels.reshape(N).astype(jnp.int32), 0) & 0xFFFF
    am = attention_mask.reshape(N).astype(jnp.int32)
    packed = (lab | (am << 16)).astype(jnp.int32).reshape(N, 1)
    if n_pad != N:
        packed = jnp.pad(packed, ((0, n_pad - N), (0, 0)))   # padded rows: mask=0

    seed_arr = jnp.array([seed], jnp.int32)
    kernel = _make_head_kernel(num_labels, dropout_p, train)

    logits_pad, partials = pl.pallas_call(
        kernel,
        out_shape=(jax.ShapeDtypeStruct((n_pad, C_PAD), jnp.float32),
                   jax.ShapeDtypeStruct((num_tiles * 8, 128), jnp.float32)),
        grid_spec=pltpu.PrefetchScalarGridSpec(
            num_scalar_prefetch=1,
            grid=(num_tiles,),
            in_specs=[
                pl.BlockSpec((tm_eff, H), lambda i, s: (i, 0)),      # x (bf16)
                pl.BlockSpec((H, C_PAD), lambda i, s: (0, 0)),       # weight (resident)
                pl.BlockSpec((1, C_PAD), lambda i, s: (0, 0)),       # bias (resident)
                pl.BlockSpec((tm_eff, 1), lambda i, s: (i, 0)),      # packed label/mask
            ],
            out_specs=(
                pl.BlockSpec((tm_eff, C_PAD), lambda i, s: (i, 0)),  # logits
                pl.BlockSpec((8, 128), lambda i, s: (i, 0)),         # per-tile partials
            ),
        ),
        compiler_params=pltpu.CompilerParams(
            dimension_semantics=("parallel",)),   # token axis independent -> megacore OK
    )(seed_arr, x, w_pad, b_pad, packed)

    logits = logits_pad[:N, :num_labels].reshape(B, S, num_labels)
    loss_sum = jnp.sum(partials[:, 0])
    cnt = jnp.sum(partials[:, 1])
    loss = loss_sum / cnt   # NaN if no active tokens, matching CrossEntropyLoss mean
    return logits, loss


# ----------------------------------------------------------------------------
# Plain-JAX glue: synthetic BERT encoder + parameter init
# ----------------------------------------------------------------------------
def synthetic_bert_encoder(input_ids, params):
    # TODO(synk): the pretrained HuggingFace BERT stack (AutoModel.from_pretrained)
    # cannot be reproduced in-script; replaced by a deterministic token+position
    # embedding encoder with layer norm producing sequence_output of the same shape.
    tok = params["tok_emb"][input_ids]                      # (B, S, H)
    pos = params["pos_emb"][None, : input_ids.shape[1], :]  # (1, S, H)
    h = tok + pos
    mu = h.mean(-1, keepdims=True)
    var = ((h - mu) ** 2).mean(-1, keepdims=True)
    return (h - mu) / jnp.sqrt(var + 1e-12)


def init_params(key, *, vocab_size, max_seq, hidden_size, num_labels):
    k1, k2, k3 = jax.random.split(key, 3)
    return {
        "tok_emb": 0.02 * jax.random.normal(k1, (vocab_size, hidden_size), jnp.float32),
        "pos_emb": 0.02 * jax.random.normal(k2, (max_seq, hidden_size), jnp.float32),
        "cls_w": 0.02 * jax.random.normal(k3, (hidden_size, num_labels), jnp.float32),
        "cls_b": jnp.zeros((num_labels,), jnp.float32),
    }


def bert_softmax_for_ner_forward(params, input_ids, attention_mask, labels, *,
                                 num_labels, dropout_p, train=False, seed=0):
    seq_out = synthetic_bert_encoder(input_ids, params)     # [B, S, H]
    logits, loss = ner_head(seq_out, params["cls_w"], params["cls_b"],
                            labels, attention_mask,
                            num_labels=num_labels, dropout_p=dropout_p,
                            train=train, seed=seed)
    return loss, logits                                     # matches (loss, logits, ...)


# Pure-JAX reference (eval mode, same bf16 stream cast + tanh-GELU formula).
def reference_forward(params, input_ids, attention_mask, labels, num_labels):
    x = synthetic_bert_encoder(input_ids, params)
    x = x.astype(jnp.bfloat16).astype(jnp.float32)           # mirror kernel's bf16 stream
    c = math.sqrt(2.0 / math.pi)
    h = 0.5 * x * (1.0 + jnp.tanh(c * (x + 0.044715 * x ** 3)))
    logits = h @ params["cls_w"] + params["cls_b"]
    logp = jax.nn.log_softmax(logits, axis=-1)
    ce = -jnp.take_along_axis(logp, labels[..., None], axis=-1)[..., 0]
    m = attention_mask.astype(jnp.float32)
    loss = jnp.sum(ce * m) / jnp.sum(m)
    return loss, logits


# ----------------------------------------------------------------------------
if __name__ == "__main__":
    # Small config consistent with the module's forward.
    batch, seq_len = 2, 16
    hidden_size, num_labels, vocab_size = 32, 9, 50
    hidden_dropout_prob = 0.1

    key = jax.random.PRNGKey(0)
    k_params, k_ids, k_labels = jax.random.split(key, 3)

    params = init_params(k_params, vocab_size=vocab_size, max_seq=seq_len,
                         hidden_size=hidden_size, num_labels=num_labels)

    input_ids = jax.random.randint(k_ids, (batch, seq_len), 0, vocab_size, jnp.int32)
    labels = jax.random.randint(k_labels, (batch, seq_len), 0, num_labels, jnp.int32)
    # First sequence fully valid, second sequence has 6 padding tokens.
    lengths = jnp.array([seq_len, seq_len - 6], jnp.int32)
    attention_mask = (jnp.arange(seq_len)[None, :] < lengths[:, None]).astype(jnp.int32)

    # Eval-mode pass (dropout = identity) + sanity check vs pure-JAX reference.
    loss, logits = bert_softmax_for_ner_forward(
        params, input_ids, attention_mask, labels,
        num_labels=num_labels, dropout_p=hidden_dropout_prob, train=False)
    jax.block_until_ready((loss, logits))

    ref_loss, ref_logits = reference_forward(params, input_ids, attention_mask,
                                             labels, num_labels)
    np.testing.assert_allclose(np.asarray(logits), np.asarray(ref_logits),
                               rtol=2e-4, atol=2e-4)
    np.testing.assert_allclose(float(loss), float(ref_loss), rtol=2e-4, atol=2e-4)

    # Train-mode pass exercising the in-kernel hash-based dropout path.
    loss_tr, logits_tr = bert_softmax_for_ner_forward(
        params, input_ids, attention_mask, labels,
        num_labels=num_labels, dropout_p=hidden_dropout_prob, train=True, seed=1234)
    jax.block_until_ready((loss_tr, logits_tr))
    assert bool(jnp.isfinite(loss_tr)), "train-mode loss not finite"
    assert bool(jnp.any(jnp.abs(logits_tr - logits) > 0)), "dropout had no effect"

    print("KERNEL_OK")
</pallas_src>

<mosaic_0001>
module attributes {stable_mosaic.version = 11 : i64} {
  func.func @kernel(%arg0: i32, %arg1: memref<1xi32, #tpu.memory_space<smem>>, %arg2: memref<32x32xbf16, #tpu.memory_space<vmem>>, %arg3: memref<32x128xf32, #tpu.memory_space<vmem>>, %arg4: memref<1x128xf32, #tpu.memory_space<vmem>>, %arg5: memref<32x1xi32, #tpu.memory_space<vmem>>, %arg6: memref<32x128xf32, #tpu.memory_space<vmem>>, %arg7: memref<8x128xf32, #tpu.memory_space<vmem>>) attributes {dimension_semantics = [#tpu.dimension_semantics<parallel>], iteration_bounds = array<i64: 1>, scalar_prefetch = 1 : i64, scratch_operands = 0 : i64, tpu.core_type = #tpu.core_type<tc>, window_params = [{transform_indices = @transform_0, window_bounds = array<i64: 32, 32>}, {pipeline_mode = #tpu.pipeline_mode<synchronous>, transform_indices = @transform_1, window_bounds = array<i64: 32, 128>}, {pipeline_mode = #tpu.pipeline_mode<synchronous>, transform_indices = @transform_2, window_bounds = array<i64: 1, 128>}, {transform_indices = @transform_3, window_bounds = array<i64: 32, 1>}, {transform_indices = @transform_4, window_bounds = array<i64: 32, 128>}, {transform_indices = @transform_5, window_bounds = array<i64: 8, 128>}]} {
    %c0 = arith.constant 0 : index
    %c0_0 = arith.constant 0 : index
    %0 = vector.load %arg2[%c0, %c0_0] : memref<32x32xbf16, #tpu.memory_space<vmem>>, vector<32x32xbf16>
    %1 = arith.extf %0 : vector<32x32xbf16> to vector<32x32xf32>
    %cst = arith.constant 5.000000e-01 : f32
    %2 = vector.broadcast %cst : f32 to vector<32x32xf32>
    %3 = arith.mulf %2, %1 : vector<32x32xf32>
    %cst_1 = arith.constant 4.471500e-02 : f32
    %4 = vector.broadcast %cst_1 : f32 to vector<32x32xf32>
    %5 = arith.mulf %4, %1 : vector<32x32xf32>
    %6 = arith.mulf %5, %1 : vector<32x32xf32>
    %7 = arith.mulf %6, %1 : vector<32x32xf32>
    %8 = arith.addf %1, %7 : vector<32x32xf32>
    %cst_2 = arith.constant 0.797884583 : f32
    %9 = vector.broadcast %cst_2 : f32 to vector<32x32xf32>
    %10 = arith.mulf %9, %8 : vector<32x32xf32>
    %11 = math.tanh %10 : vector<32x32xf32>
    %cst_3 = arith.constant 1.000000e+00 : f32
    %12 = vector.broadcast %cst_3 : f32 to vector<32x32xf32>
    %13 = arith.addf %12, %11 : vector<32x32xf32>
    %14 = arith.mulf %3, %13 : vector<32x32xf32>
    %c0_4 = arith.constant 0 : index
    %c0_5 = arith.constant 0 : index
    %15 = vector.load %arg3[%c0_4, %c0_5] : memref<32x128xf32, #tpu.memory_space<vmem>>, vector<32x128xf32>
    %cst_6 = arith.constant dense<0.000000e+00> : vector<32x128xf32>
    %16 = tpu.matmul %14, %15, %cst_6 {dimension_numbers = #tpu.dot_dimension_numbers<[1], [0], [0], [1], [0, 0, 1, 1], [], []>} : vector<32x32xf32>, vector<32x128xf32>, vector<32x128xf32> -> vector<32x128xf32>
    %c0_7 = arith.constant 0 : index
    %c0_8 = arith.constant 0 : index
    %17 = vector.load %arg4[%c0_7, %c0_8] : memref<1x128xf32, #tpu.memory_space<vmem>>, vector<1x128xf32>
    %18 = vector.broadcast %17 : vector<1x128xf32> to vector<32x128xf32>
    %19 = arith.addf %16, %18 : vector<32x128xf32>
    %c0_9 = arith.constant 0 : index
    %c0_10 = arith.constant 0 : index
    %20 = vector.load %arg6[%c0_9, %c0_10] : memref<32x128xf32, #tpu.memory_space<vmem>>, vector<32x128xf32>
    tpu.vector_store %arg6[%c0_9, %c0_10], %19 {strides = array<i32>} : memref<32x128xf32, #tpu.memory_space<vmem>>, vector<32x128xf32>,
    %c0_11 = arith.constant 0 : index
    %c0_12 = arith.constant 0 : index
    %21 = vector.load %arg5[%c0_11, %c0_12] : memref<32x1xi32, #tpu.memory_space<vmem>>, vector<32x1xi32>
    %c65535_i32 = arith.constant 65535 : i32
    %22 = vector.broadcast %c65535_i32 : i32 to vector<32x1xi32>
    %23 = arith.andi %21, %22 : vector<32x1xi32>
    %c16_i32 = arith.constant 16 : i32
    %24 = vector.broadcast %c16_i32 : i32 to vector<32x1xi32>
    %25 = arith.shrsi %21, %24 : vector<32x1xi32>
    %c1_i32 = arith.constant 1 : i32
    %26 = vector.broadcast %c1_i32 : i32 to vector<32x1xi32>
    %27 = arith.andi %25, %26 : vector<32x1xi32>
    %28 = arith.sitofp %27 : vector<32x1xi32> to vector<32x1xf32>
    %29 = tpu.iota {dimensions = array<i32: 1>} : vector<32x128xi32>
    %c9_i32 = arith.constant 9 : i32
    %30 = vector.broadcast %c9_i32 : i32 to vector<32x128xi32>
    %31 = arith.cmpi slt, %29, %30 : vector<32x128xi32>
    %cst_13 = arith.constant -1.000000e+30 : f32
    %32 = vector.broadcast %cst_13 : f32 to vector<32x128xf32>
    %33 = arith.select %31, %19, %32 : vector<32x128xi1>, vector<32x128xf32>
    %cst_14 = arith.constant dense<0xFF800000> : vector<32xf32>
    %34 = vector.multi_reduction <maximumf>, %33, %cst_14 [1] : vector<32x128xf32> to vector<32xf32>
    %35 = vector.shape_cast %34 : vector<32xf32> to vector<32x1xf32>
    %36 = vector.broadcast %35 : vector<32x1xf32> to vector<32x128xf32>
    %37 = arith.subf %33, %36 : vector<32x128xf32>
    %38 = math.exp %37 : vector<32x128xf32>
    %cst_15 = arith.constant 0.000000e+00 : f32
    %39 = vector.broadcast %cst_15 : f32 to vector<32x128xf32>
    %40 = arith.select %31, %38, %39 : vector<32x128xi1>, vector<32x128xf32>
    %cst_16 = arith.constant dense<0.000000e+00> : vector<32xf32>
    %41 = vector.multi_reduction <add>, %40, %cst_16 [1] : vector<32x128xf32> to vector<32xf32>
    %42 = vector.shape_cast %41 : vector<32xf32> to vector<32x1xf32>
    %43 = math.log %42 : vector<32x1xf32>
    %44 = arith.addf %35, %43 : vector<32x1xf32>
    %45 = vector.broadcast %23 : vector<32x1xi32> to vector<32x128xi32>
    %46 = arith.cmpi eq, %29, %45 : vector<32x128xi32>
    %cst_17 = arith.constant 0.000000e+00 : f32
    %47 = vector.broadcast %cst_17 : f32 to vector<32x128xf32>
    %48 = arith.select %46, %19, %47 : vector<32x128xi1>, vector<32x128xf32>
    %cst_18 = arith.constant dense<0.000000e+00> : vector<32xf32>
    %49 = vector.multi_reduction <add>, %48, %cst_18 [1] : vector<32x128xf32> to vector<32xf32>
    %50 = vector.shape_cast %49 : vector<32xf32> to vector<32x1xf32>
    %51 = arith.subf %44, %50 : vector<32x1xf32>
    %52 = arith.mulf %51, %28 : vector<32x1xf32>
    %53 = vector.shape_cast %52 : vector<32x1xf32> to vector<1x32x1xf32>
    %cst_19 = arith.constant dense<0.000000e+00> : vector<1xf32>
    %54 = vector.multi_reduction <add>, %53, %cst_19 [1, 2] : vector<1x32x1xf32> to vector<1xf32>
    %55 = vector.shape_cast %54 : vector<1xf32> to vector<1x1x1xf32>
    %56 = vector.extract %55[0, 0, 0] : f32 from vector<1x1x1xf32>
    %57 = vector.broadcast %56 : f32 to vector<1x1xf32>
    %58 = vector.shape_cast %28 : vector<32x1xf32> to vector<1x32x1xf32>
    %cst_20 = arith.constant dense<0.000000e+00> : vector<1xf32>
    %59 = vector.multi_reduction <add>, %58, %cst_20 [1, 2] : vector<1x32x1xf32> to vector<1xf32>
    %60 = vector.shape_cast %59 : vector<1xf32> to vector<1x1x1xf32>
    %61 = vector.extract %60[0, 0, 0] : f32 from vector<1x1x1xf32>
    %62 = vector.broadcast %61 : f32 to vector<1x1xf32>
    %63 = tpu.iota {dimensions = array<i32: 0>} : vector<8x128xi32>
    %64 = tpu.iota {dimensions = array<i32: 1>} : vector<8x128xi32>
    %c0_i32 = arith.constant 0 : i32
    %65 = vector.broadcast %c0_i32 : i32 to vector<8x128xi32>
    %66 = arith.cmpi eq, %63, %65 : vector<8x128xi32>
    %c0_i32_21 = arith.constant 0 : i32
    %67 = vector.broadcast %c0_i32_21 : i32 to vector<8x128xi32>
    %68 = arith.cmpi eq, %64, %67 : vector<8x128xi32>
    %69 = arith.andi %66, %68 : vector<8x128xi1>
    %c0_i32_22 = arith.constant 0 : i32
    %70 = vector.broadcast %c0_i32_22 : i32 to vector<8x128xi32>
    %71 = arith.cmpi eq, %63, %70 : vector<8x128xi32>
    %c1_i32_23 = arith.constant 1 : i32
    %72 = vector.broadcast %c1_i32_23 : i32 to vector<8x128xi32>
    %73 = arith.cmpi eq, %64, %72 : vector<8x128xi32>
    %74 = arith.andi %71, %73 : vector<8x128xi1>
    %cst_24 = arith.constant 0.000000e+00 : f32
    %75 = vector.shape_cast %62 : vector<1x1xf32> to vector<1x1xf32>
    %76 = vector.broadcast %75 : vector<1x1xf32> to vector<8x128xf32>
    %77 = vector.broadcast %cst_24 : f32 to vector<8x128xf32>
    %78 = arith.select %74, %76, %77 : vector<8x128xi1>, vector<8x128xf32>
    %79 = vector.shape_cast %57 : vector<1x1xf32> to vector<1x1xf32>
    %80 = vector.broadcast %79 : vector<1x1xf32> to vector<8x128xf32>
    %81 = arith.select %69, %80, %78 : vector<8x128xi1>, vector<8x128xf32>
    %c0_25 = arith.constant 0 : index
    %c0_26 = arith.constant 0 : index
    %82 = vector.load %arg7[%c0_25, %c0_26] : memref<8x128xf32, #tpu.memory_space<vmem>>, vector<8x128xf32>
    tpu.vector_store %arg7[%c0_25, %c0_26], %81 {strides = array<i32>} : memref<8x128xf32, #tpu.memory_space<vmem>>, vector<8x128xf32>,
    return
  }
  func.func @transform_0(%arg0: i32, %arg1: memref<1xi32, #tpu.memory_space<smem>>) -> (i32, i32) {
    %c0_i32 = arith.constant 0 : i32
    %c0_i32_0 = arith.constant 0 : i32
    return %arg0, %c0_i32 : i32, i32
  }
  func.func @transform_1(%arg0: i32, %arg1: memref<1xi32, #tpu.memory_space<smem>>) -> (i32, i32) {
    %c0_i32 = arith.constant 0 : i32
    %c0_i32_0 = arith.constant 0 : i32
    %c0_i32_1 = arith.constant 0 : i32
    return %c0_i32, %c0_i32_0 : i32, i32
  }
  func.func @transform_2(%arg0: i32, %arg1: memref<1xi32, #tpu.memory_space<smem>>) -> (i32, i32) {
    %c0_i32 = arith.constant 0 : i32
    %c0_i32_0 = arith.constant 0 : i32
    %c0_i32_1 = arith.constant 0 : i32
    return %c0_i32, %c0_i32_0 : i32, i32
  }
  func.func @transform_3(%arg0: i32, %arg1: memref<1xi32, #tpu.memory_space<smem>>) -> (i32, i32) {
    %c0_i32 = arith.constant 0 : i32
    %c0_i32_0 = arith.constant 0 : i32
    return %arg0, %c0_i32 : i32, i32
  }
  func.func @transform_4(%arg0: i32, %arg1: memref<1xi32, #tpu.memory_space<smem>>) -> (i32, i32) {
    %c0_i32 = arith.constant 0 : i32
    %c0_i32_0 = arith.constant 0 : i32
    return %arg0, %c0_i32 : i32, i32
  }
  func.func @transform_5(%arg0: i32, %arg1: memref<1xi32, #tpu.memory_space<smem>>) -> (i32, i32) {
    %c0_i32 = arith.constant 0 : i32
    %c0_i32_0 = arith.constant 0 : i32
    return %arg0, %c0_i32 : i32, i32
  }
}

</mosaic_0001>

<llo_original>
// kernel: tpu_custom_call.1
$region0: #{tpu_custom_call.1}
  #allocation0 [shape = 'u32[]', space=smem, size = 0x4, offset = 0x4, fixed_abs, tag = 'smem constant byte address 0x4 - core index']
  #allocation1 [shape = 'u32[144,128]{1,0:T(1,128)}', space=vmem, size = 0x12000, scoped, tag = 'internal scratch']
  #allocation2 [shape = 's32[1]{0}', space=sflag, size = 0x4, scoped, tag = 'scoped memory for tpu_custom_call.1']
  #allocation3 [shape = 's32[1]{0:T(128)S(6)}', space=smem, size = 0x200, scoped, tag = 'prefetched SMEM operand 0']
  %s0 = inlined_call_operand.<no memory space> [shape: s32[1], index: 0, kind: input, shape index: {}]
  %s1 = inlined_call_operand.hbm [shape: bf16[32,32], index: 1, kind: input, shape index: {}]
  %s2 = inlined_call_operand.vmem [shape: f32[32,128], index: 2, kind: input, shape index: {}]
  %s3 = inlined_call_operand.vmem [shape: f32[1,128], index: 3, kind: input, shape index: {}]
  %s4 = inlined_call_operand.vmem [shape: s32[32,1], index: 4, kind: input, shape index: {}]
  %s5 = inlined_call_operand.hbm [shape: f32[32,128], index: 5, kind: output, shape index: {0}]
  %s6 = inlined_call_operand.hbm [shape: f32[8,128], index: 6, kind: output, shape index: {1}]
  %7 = xla_tuple %s5, %s6
  %s8 = sld [smem:[#allocation0]]
  $region38: #{tpu_custom_call.1} parent=0
    _
  %s10 = ssub.s32 1, %s8
  %s11 = scalar_select 0, %s10, %s8
  %12 = sst [smem:[#allocation3]] %s0
  $region1: #{tpu_custom_call.1} parent=0
    #allocation4 [shape = 'u8[8192]{0}', space=vmem, size = 0x2000, scoped, tag = 'input window, operand 1, single buffered']
    #allocation5 [shape = 's32[1]{0}', space=sflag, size = 0x4, scoped, tag = 'scoped memory for tpu_custom_call.1']
    #allocation6 [shape = 's32[1]{0}', space=sflag, size = 0x4, scoped, tag = 'scoped memory for tpu_custom_call.1']
    #allocation7 [shape = 'u8[16384]{0}', space=vmem, size = 0x4000, scoped, tag = 'output window, operand 0, single buffered']
    #allocation8 [shape = 'u8[4096]{0}', space=vmem, size = 0x1000, scoped, tag = 'output window, operand 1, single buffered']
    #allocation9 [shape = 's32[1]{0}', space=sflag, size = 0x4, scoped, tag = 'scoped memory for tpu_custom_call.1']
    %13 = vsyncpa [#allocation5], 0
    %14 = vsyncpa [#allocation6], 0
    %15 = vsyncpa [#allocation9], 0
    // Predicated region
    $region2: #{tpu_custom_call.1} parent=1 // pred_check
      _
    $region3: #{tpu_custom_call.1} parent=1 // pred_check_branch
      %17 = sbr.rel (0) target = $region5
    $region4: #{tpu_custom_call.1} parent=1 // pred_region
      %s19 = ssub.s32 256, 256
      %20 = vsyncadd [#allocation5], %s19
      %s21 = sshll.u32 [#allocation4], 4
      %s22 = int_to_ptr.vmem [resolvable:$true] %s21
      %27 = dma.hbm_to_vmem [thread:$0]  %s1, 256, %s22, [#allocation5], 64, 64, 4
    $region5: #{tpu_custom_call.1} parent=1 // pred_fallthru
      _
    // Predicated region
    $region6: #{tpu_custom_call.1} parent=1 // pred_check
      _
    $region7: #{tpu_custom_call.1} parent=1 // pred_check_branch
      %29 = sbr.rel (0) target = $region9
    $region8: #{tpu_custom_call.1} parent=1 // pred_region
      _
    $region9: #{tpu_custom_call.1} parent=1 // pred_fallthru
      _
    // Predicated region
    $region10: #{tpu_custom_call.1} parent=1 // pred_check
      _
    $region11: #{tpu_custom_call.1} parent=1 // pred_check_branch
      %31 = sbr.rel (0) target = $region13
    $region12: #{tpu_custom_call.1} parent=1 // pred_region
      _
    $region13: #{tpu_custom_call.1} parent=1 // pred_fallthru
      _
    // Predicated region
    $region14: #{tpu_custom_call.1} parent=1 // pred_check
      _
    $region15: #{tpu_custom_call.1} parent=1 // pred_check_branch
      %33 = sbr.rel (0) target = $region17
    $region16: #{tpu_custom_call.1} parent=1 // pred_region
      _
    $region17: #{tpu_custom_call.1} parent=1 // pred_fallthru
      _
    // Predicated region
    $region18: #{tpu_custom_call.1} parent=1 // pred_check
      _
    $region19: #{tpu_custom_call.1} parent=1 // pred_check_branch
      %35 = sbr.rel (0) target = $region21
    $region20: #{tpu_custom_call.1} parent=1 // pred_region
      %36 = dma.done [#allocation5], 256
    $region21: #{tpu_custom_call.1} parent=1 // pred_fallthru
      _
    %v37 = vld [vmem:[#allocation4] sm:$0xf]
    %v38 = vld [vmem:[#allocation4 + $0x4] sm:$0xf]
    %v39 = vld [vmem:[#allocation4 + $0x8] sm:$0xf]
    %v40 = vld [vmem:[#allocation4 + $0xc] sm:$0xf]
    %v41 = vunpack.c.l.bf16 %v37
    %v42 = vunpack.c.l.bf16 %v38
    %v43 = vunpack.c.l.bf16 %v39
    %v44 = vunpack.c.l.bf16 %v40
    %v45 = vmul.f32 %v41, 0.5
    %v46 = vmul.f32 %v42, 0.5
    %v47 = vmul.f32 %v43, 0.5
    %v48 = vmul.f32 %v44, 0.5
    %v49 = vmul.f32 %v41, 0.044715
    %v50 = vmul.f32 %v42, 0.044715
    %v51 = vmul.f32 %v43, 0.044715
    %v52 = vmul.f32 %v44, 0.044715
    %v53 = vmul.f32 %v49, %v41
    %v54 = vmul.f32 %v50, %v42
    %v55 = vmul.f32 %v51, %v43
    %v56 = vmul.f32 %v52, %v44
    %v57 = vmul.f32 %v53, %v41
    %v58 = vmul.f32 %v54, %v42
    %v59 = vmul.f32 %v55, %v43
    %v60 = vmul.f32 %v56, %v44
    %v61 = vadd.f32 %v41, %v57
    %v62 = vadd.f32 %v42, %v58
    %v63 = vadd.f32 %v43, %v59
    %v64 = vadd.f32 %v44, %v60
    %v65 = vmul.f32 %v61, 0.7978846
    %v66 = vmul.f32 %v62, 0.7978846
    %v67 = vmul.f32 %v63, 0.7978846
    %v68 = vmul.f32 %v64, 0.7978846
    %v69 = vtanh.pop %v65
    %v70 = vtanh.pop %v66
    %v71 = vtanh.pop %v67
    %v72 = vtanh.pop %v68
    %v73 = vadd.f32 %v69, 1.0
    %v74 = vadd.f32 %v70, 1.0
    %v75 = vadd.f32 %v71, 1.0
    %v76 = vadd.f32 %v72, 1.0
    %v77 = vmul.f32 %v45, %v73
    %v78 = vmul.f32 %v46, %v74
    %v79 = vmul.f32 %v47, %v75
    %v80 = vmul.f32 %v48, %v76
    %v81 = vld [vmem:[%s2] sm:$0xff]
    %v82 = vld [vmem:[%s2 + $0x8] sm:$0xff]
    %v83 = vld [vmem:[%s2 + $0x10] sm:$0xff]
    %v84 = vld [vmem:[%s2 + $0x18] sm:$0xff]
    %v85 = vld [vmem:[%s3] sm:$0x1]
    %v87 = vlaneseq
    %v88 = vshrl.u32 %v87, 7
    %v89 = vsub.s32 0, %v88
    %v90 = vrot.slane %v85, %v89
    %vm92 = vcmask 261120
    %v94 = vsel %vm92, %v77, 0
    %v97 = vsel %vm92, %v78, 0
    %v100 = vsel %vm92, %v79, 0
    %v103 = vsel %vm92, %v80, 0
    %105 = vmatprep.subr.mxu0 0.0
    %106 = vmatpush1.msra.mxu0 %v81
    %107 = vmatprep.subr.mxu0 0.0
    %108 = vmatpush1.msra.mxu0 %v82
    %109 = vmatprep.subr.mxu0 0.0
    %110 = vmatpush1.msra.mxu0 %v83
    %111 = vmatprep.subr.mxu0 0.0
    %112 = vmatpush1.msra.mxu0 %v84
    %113 = vmatprep.subr.mxu0 0.0
    %114 = vmatpush1.msra.mxu0 0.0
    %115 = vmatprep.subr.mxu0 0.0
    %116 = vmatpush1.msra.mxu0 0.0
    %117 = vmatprep.subr.mxu0 0.0
    %118 = vmatpush1.msra.mxu0 0.0
    %119 = vmatprep.subr.mxu0 0.0
    %120 = vmatpush1.msra.mxu0 0.0
    %121 = vmatprep.subr.mxu0 0.0
    %122 = vmatpush1.msra.mxu0 0.0
    %123 = vmatprep.subr.mxu0 0.0
    %124 = vmatpush1.msra.mxu0 0.0
    %125 = vmatprep.subr.mxu0 0.0
    %126 = vmatpush1.msra.mxu0 0.0
    %127 = vmatprep.subr.mxu0 0.0
    %128 = vmatpush1.msra.mxu0 0.0
    %129 = vmatprep.subr.mxu0 0.0
    %130 = vmatpush1.msra.mxu0 0.0
    %131 = vmatprep.subr.mxu0 0.0
    %132 = vmatpush1.msra.mxu0 0.0
    %133 = vmatprep.subr.mxu0 0.0
    %134 = vmatpush1.msra.mxu0 0.0
    %135 = vmatprep.subr.mxu0 0.0
    %136 = vmatpush1.msra.mxu0 0.0
    %137 = vmatprep.subr.mxu0 0.0
    %138 = vmatpush1.msra.mxu0 0.0
    %139 = vmatprep.subr.mxu0 0.0
    %140 = vmatpush1.msra.mxu0 0.0
    %141 = vmatprep.subr.mxu0 0.0
    %142 = vmatpush1.msra.mxu0 0.0
    %143 = vmatprep.subr.mxu0 0.0
    %144 = vmatpush1.msra.mxu0 0.0
    %145 = vmatprep.subr.mxu0 0.0
    %146 = vmatpush1.msra.mxu0 0.0
    %147 = vmatprep.subr.mxu0 0.0
    %148 = vmatpush1.msra.mxu0 0.0
    %149 = vmatprep.subr.mxu0 0.0
    %150 = vmatpush1.msra.mxu0 0.0
    %151 = vmatprep.subr.mxu0 0.0
    %152 = vmatpush1.msra.mxu0 0.0
    %153 = vmatprep.subr.mxu0 0.0
    %154 = vmatpush1.msra.mxu0 0.0
    %155 = vmatprep.subr.mxu0 0.0
    %156 = vmatpush1.msra.mxu0 0.0
    %157 = vmatprep.subr.mxu0 0.0
    %158 = vmatpush1.msra.mxu0 0.0
    %159 = vmatprep.subr.mxu0 0.0
    %160 = vmatpush1.msra.mxu0 0.0
    %161 = vmatprep.subr.mxu0 0.0
    %162 = vmatpush1.msra.mxu0 0.0
    %163 = vmatprep.subr.mxu0 0.0
    %164 = vmatpush1.msra.mxu0 0.0
    %165 = vmatprep.subr.mxu0 0.0
    %166 = vmatpush1.msra.mxu0 0.0
    %167 = vmatprep.subr.mxu0 0.0
    %168 = vmatpush1.msra.mxu0 0.0
    %169 = vmatprep.mubr.f32.mxu0 0.0
    %170 = vmatmul.mubr.f32.gmra.mrb[0].mxu0 %v94
    %v171 = vpop.f32.mrb[0].mxu0
    %v172 = vadd.f32 %v90, %v171
    %v173 = vpop.f32.mrb[0].mxu0
    %174 = vmatprep.mubr.f32.mxu0 0.0
    %175 = vmatmul.mubr.f32.gmra.mrb[0].mxu0 %v97
    %v176 = vpop.f32.mrb[0].mxu0
    %v177 = vadd.f32 %v90, %v176
    %v178 = vpop.f32.mrb[0].mxu0
    %179 = vmatprep.mubr.f32.mxu0 0.0
    %180 = vmatmul.mubr.f32.gmra.mrb[0].mxu0 %v100
    %v181 = vpop.f32.mrb[0].mxu0
    %v182 = vadd.f32 %v90, %v181
    %v183 = vpop.f32.mrb[0].mxu0
    %184 = vmatprep.mubr.f32.mxu0 0.0
    %185 = vmatmul.mubr.f32.gmra.mrb[0].mxu0 %v103
    %v186 = vpop.f32.mrb[0].mxu0
    %v187 = vadd.f32 %v90, %v186
    %v188 = vpop.f32.mrb[0].mxu0
    %189 = vdwg.mxu0
    %190 = vst [vmem:[#allocation7] sm:$0xff] %v172
    %191 = vst [vmem:[#allocation7 + $0x8] sm:$0xff] %v177
    %192 = vst [vmem:[#allocation7 + $0x10] sm:$0xff] %v182
    %193 = vst [vmem:[#allocation7 + $0x18] sm:$0xff] %v187
    %v194 = vld [vmem:[%s4] sm:$0xff]
    %v195 = vld [vmem:[%s4 + $0x8] sm:$0xff]
    %v196 = vld [vmem:[%s4 + $0x10] sm:$0xff]
    %v197 = vld [vmem:[%s4 + $0x18] sm:$0xff]
    %v198 = vand.u32 %v194, 65535
    %v199 = vand.u32 %v195, 65535
    %v200 = vand.u32 %v196, 65535
    %v201 = vand.u32 %v197, 65535
    %v202 = vshra.s32 %v194, 16
    %v203 = vshra.s32 %v195, 16
    %v204 = vshra.s32 %v196, 16
    %v205 = vshra.s32 %v197, 16
    %v206 = vand.u32 %v202, 1
    %v207 = vand.u32 %v203, 1
    %v208 = vand.u32 %v204, 1
    %v209 = vand.u32 %v205, 1
    %v210 = vcvt.s32.f32 %v206
    %v211 = vcvt.s32.f32 %v207
    %v212 = vcvt.s32.f32 %v208
    %v213 = vcvt.s32.f32 %v209
    %v214 = vlaneseq
    %v215 = vand.u32 %v214, 127
    %vm216 = vcmp.lt.s32.totalorder %v215, 9
    %v217 = vsel %vm216, %v172, -1e+30
    %v218 = vsel %vm216, %v177, -1e+30
    %v219 = vsel %vm216, %v182, -1e+30
    %v220 = vsel %vm216, %v187, -1e+30
    %221 = vmax.xlane.f32.xlu0 %v217
    %v222 = vpop.xlane.xlu0 %221
    %223 = vmax.xlane.f32.xlu0 %v218
    %v224 = vpop.xlane.xlu0 %223
    %225 = vmax.xlane.f32.xlu0 %v219
    %v226 = vpop.xlane.xlu0 %225
    %227 = vmax.xlane.f32.xlu0 %v220
    %v228 = vpop.xlane.xlu0 %227
    %v229 = vsub.f32 %v217, %v222
    %v230 = vsub.f32 %v218, %v224
    %v231 = vsub.f32 %v219, %v226
    %v232 = vsub.f32 %v220, %v228
    %v233 = vmul.f32 %v229, 1.442695
    %v234 = vpow.pop %v233
    %v235 = vmul.f32 %v230, 1.442695
    %v236 = vpow.pop %v235
    %v237 = vmul.f32 %v231, 1.442695
    %v238 = vpow.pop %v237
    %v239 = vmul.f32 %v232, 1.442695
    %v240 = vpow.pop %v239
    %v241 = vsel %vm216, %v234, 0.0
    %v242 = vsel %vm216, %v236, 0.0
    %v243 = vsel %vm216, %v238, 0.0
    %v244 = vsel %vm216, %v240, 0.0
    %245 = vadd.xlane.f32.xlu0 %v241
    %v246 = vpop.xlane.xlu0 %245
    %247 = vadd.xlane.f32.xlu0 %v242
    %v248 = vpop.xlane.xlu0 %247
    %249 = vadd.xlane.f32.xlu0 %v243
    %v250 = vpop.xlane.xlu0 %249
    %251 = vadd.xlane.f32.xlu0 %v244
    %v252 = vpop.xlane.xlu0 %251
    %v253 = vlog2.pop %v246
    %v254 = vmul.f32 %v253, 0.6931472
    %v255 = vlog2.pop %v248
    %v256 = vmul.f32 %v255, 0.6931472
    %v257 = vlog2.pop %v250
    %v258 = vmul.f32 %v257, 0.6931472
    %v259 = vlog2.pop %v252
    %v260 = vmul.f32 %v259, 0.6931472
    %v261 = vadd.f32 %v222, %v254
    %v262 = vadd.f32 %v224, %v256
    %v263 = vadd.f32 %v226, %v258
    %v264 = vadd.f32 %v228, %v260
    %265 = vset.pattern.permute.xlu0 0
    %266 = vperm.xlu0 %265, %v198
    %v267 = vpop.permute.xlu0 %266
    %268 = vset.pattern.permute.xlu0 0
    %269 = vperm.xlu0 %268, %v199
    %v270 = vpop.permute.xlu0 %269
    %271 = vset.pattern.permute.xlu0 0
    %272 = vperm.xlu0 %271, %v200
    %v273 = vpop.permute.xlu0 %272
    %274 = vset.pattern.permute.xlu0 0
    %275 = vperm.xlu0 %274, %v201
    %v276 = vpop.permute.xlu0 %275
    %vm277 = vcmp.eq.s32.totalorder %v215, %v267
    %vm278 = vcmp.eq.s32.totalorder %v215, %v270
    %vm279 = vcmp.eq.s32.totalorder %v215, %v273
    %vm280 = vcmp.eq.s32.totalorder %v215, %v276
    %v281 = vsel %vm277, %v172, 0.0
    %v282 = vsel %vm278, %v177, 0.0
    %v283 = vsel %vm279, %v182, 0.0
    %v284 = vsel %vm280, %v187, 0.0
    %285 = vadd.xlane.f32.xlu0 %v281
    %v286 = vpop.xlane.xlu0 %285
    %287 = vadd.xlane.f32.xlu0 %v282
    %v288 = vpop.xlane.xlu0 %287
    %289 = vadd.xlane.f32.xlu0 %v283
    %v290 = vpop.xlane.xlu0 %289
    %291 = vadd.xlane.f32.xlu0 %v284
    %v292 = vpop.xlane.xlu0 %291
    %v293 = vsub.f32 %v261, %v286
    %v294 = vsub.f32 %v262, %v288
    %v295 = vsub.f32 %v263, %v290
    %v296 = vsub.f32 %v264, %v292
    %v297 = vmul.f32 %v293, %v210
    %v298 = vmul.f32 %v294, %v211
    %v299 = vmul.f32 %v295, %v212
    %v300 = vmul.f32 %v296, %v213
    %vm301 = vcmask 7168
    %v302 = vsel %vm301, %v297, 0.0
    %v303 = vsel %vm301, %v298, 0.0
    %v304 = vadd.f32 %v302, %v303
    %v305 = vsel %vm301, %v299, 0.0
    %v306 = vadd.f32 %v304, %v305
    %v307 = vsel %vm301, %v300, 0.0
    %v308 = vadd.f32 %v306, %v307
    %309 = vadd.xlane.f32.xlu0 %v308
    %v310 = vpop.xlane.xlu0 %309
    %v311 = vrot.slane %v310, 4
    %v312 = vadd.f32 %v310, %v311
    %v313 = vrot.slane %v312, 2
    %v314 = vadd.f32 %v312, %v313
    %v315 = vrot.slane %v314, 1
    %v316 = vadd.f32 %v314, %v315
    %s317 = vtos %v316
    %v318 = vsel %vm301, %v210, 0.0
    %v319 = vsel %vm301, %v211, 0.0
    %v320 = vadd.f32 %v318, %v319
    %v321 = vsel %vm301, %v212, 0.0
    %v322 = vadd.f32 %v320, %v321
    %v323 = vsel %vm301, %v213, 0.0
    %v324 = vadd.f32 %v322, %v323
    %325 = vadd.xlane.f32.xlu0 %v324
    %v326 = vpop.xlane.xlu0 %325
    %v327 = vrot.slane %v326, 4
    %v328 = vadd.f32 %v326, %v327
    %v329 = vrot.slane %v328, 2
    %v330 = vadd.f32 %v328, %v329
    %v331 = vrot.slane %v330, 1
    %v332 = vadd.f32 %v330, %v331
    %s333 = vtos %v332
    %v334 = vlaneseq
    %v335 = vshrl.u32 %v334, 7
    %vm336 = vcmp.eq.s32.totalorder %v335, 0
    %vm337 = vcmp.eq.s32.totalorder %v215, 0
    %vm338 = vmand %vm336, %vm337
    %vm339 = vcmp.eq.s32.totalorder %v215, 1
    %vm340 = vmand %vm336, %vm339
    %v341 = vstv %s333
    %v342 = vsel %vm340, %v341, 0.0
    %v343 = vstv %s317
    %v344 = vsel %vm338, %v343, %v342
    %345 = vst [vmem:[#allocation8] sm:$0xff] %v344
    // Predicated region
    $region22: #{tpu_custom_call.1} parent=1 // pred_check
      _
    $region23: #{tpu_custom_call.1} parent=1 // pred_check_branch
      %347 = sbr.rel (0) target = $region25
    $region24: #{tpu_custom_call.1} parent=1 // pred_region
      %s349 = ssub.s32 512, 512
      %350 = vsyncadd [#allocation6], %s349
      %s351 = sshll.u32 [#allocation7], 4
      %s352 = int_to_ptr.vmem [resolvable:$true] %s351
      %357 = dma.vmem_to_hbm [thread:$0]  %s352, 512, %s5, [#allocation6], 128, 128, 8
    $region25: #{tpu_custom_call.1} parent=1 // pred_fallthru
      _
    // Predicated region
    $region26: #{tpu_custom_call.1} parent=1 // pred_check
      _
    $region27: #{tpu_custom_call.1} parent=1 // pred_check_branch
      %359 = sbr.rel (0) target = $region29
    $region28: #{tpu_custom_call.1} parent=1 // pred_region
      %s361 = ssub.s32 128, 128
      %362 = vsyncadd [#allocation9], %s361
      %s364 = sshll.u32 [#allocation8], 4
      %s365 = int_to_ptr.vmem [resolvable:$true] %s364
      %367 = dma.vmem_to_hbm [thread:$0]  %s365, 128, %s6, [#allocation9]
    $region29: #{tpu_custom_call.1} parent=1 // pred_fallthru
      _
    // Predicated region
    $region30: #{tpu_custom_call.1} parent=1 // pred_check
      _
    $region31: #{tpu_custom_call.1} parent=1 // pred_check_branch
      %369 = sbr.rel (0) target = $region33
    $region32: #{tpu_custom_call.1} parent=1 // pred_region
      %370 = dma.done [#allocation6], 512
    $region33: #{tpu_custom_call.1} parent=1 // pred_fallthru
      _
    // Predicated region
    $region34: #{tpu_custom_call.1} parent=1 // pred_check
      _
    $region35: #{tpu_custom_call.1} parent=1 // pred_check_branch
      %372 = sbr.rel (0) target = $region37
    $region36: #{tpu_custom_call.1} parent=1 // pred_region
      %373 = dma.done [#allocation9], 128
    $region37: #{tpu_custom_call.1} parent=1 // pred_fallthru
      _
    %374 = vsyncpa [#allocation5], 1
    %375 = vsyncpa [#allocation6], 1
    %376 = vsyncpa [#allocation9], 1

</llo_original>
